<compile_context>
chip_gen: v5e
topology: v5e:2x2
jax: 0.10.0
libtpu: 0.0.40
codegen_flags: <defaults>
</compile_context>

<pallas_src>
import functools

import numpy as np
import jax
import jax.numpy as jnp
from jax.experimental import pallas as pl
from jax.experimental.pallas import tpu as pltpu

LN_EPS = 1e-5  # torch.nn.LayerNorm default eps


# ----------------------------- helpers -----------------------------

def _layernorm(x, g, b):
    # x: (T, C) f32 ; g, b broadcastable (1, C)
    mu = jnp.mean(x, axis=-1, keepdims=True)
    xc = x - mu
    var = jnp.mean(xc * xc, axis=-1, keepdims=True)
    return xc * jax.lax.rsqrt(var + LN_EPS) * g + b


# ----------------------------- Pallas kernels -----------------------------

def _patch_embed_kernel(x_ref, w_ref, b_ref, pos_ref, o_ref):
    # x: (1, Np, Cin*ph*pw) f32, w: (Cin*ph*pw, emb) bf16,
    # b: (1, emb) f32, pos: (Np, emb) f32  -> o: (1, Np, emb) f32
    o_ref[0] = (
        jnp.dot(x_ref[0].astype(jnp.bfloat16), w_ref[...],
                preferred_element_type=jnp.float32)
        + b_ref[...] + pos_ref[...]
    )


def _encoder_kernel(x_ref, ln1g_ref, ln1b_ref, wqkv_ref, wproj_ref, bproj_ref,
                    ln2g_ref, ln2b_ref, wfc1_ref, bfc1_ref, wfc2_ref, bfc2_ref,
                    lng_ref, lnb_ref, o_ref, act_ref, *, num_heads):
    """grid = (B, L): one batch element per outer step, all layers inner.

    The running activation lives in act_ref (VMEM scratch, f32) and persists
    across the layer axis; the final LayerNorm is fused into the last layer.
    """
    l = pl.program_id(1)
    n_layers = pl.num_programs(1)

    @pl.when(l == 0)
    def _():
        act_ref[...] = x_ref[0].astype(jnp.float32)

    x = act_ref[...]                      # (T, C) f32
    T, C = x.shape
    hd = C // num_heads
    scale = jnp.float32(hd ** -0.5)

    # ---------------- attention branch ----------------
    xn = _layernorm(x, ln1g_ref[0], ln1b_ref[0]).astype(jnp.bfloat16)
    qkv = jnp.dot(xn, wqkv_ref[0], preferred_element_type=jnp.float32)  # (T, 3C)

    q_all = qkv[:, 0 * C:1 * C].astype(jnp.bfloat16)
    k_all = qkv[:, 1 * C:2 * C].astype(jnp.bfloat16)
    v_all = qkv[:, 2 * C:3 * C].astype(jnp.bfloat16)
    wproj = wproj_ref[0]                  # (C, C) bf16

    attn_acc = jnp.zeros((T, C), jnp.float32)
    for h in range(num_heads):            # small static unroll; all MXU matmuls
        sl = slice(h * hd, (h + 1) * hd)
        qh, kh, vh = q_all[:, sl], k_all[:, sl], v_all[:, sl]
        # q @ k^T : contract on the head dim, no transpose materialized.
        att = jax.lax.dot_general(
            qh, kh, (((1,), (1,)), ((), ())),
            preferred_element_type=jnp.float32) * scale                 # (T, T)
        att = att - jnp.max(att, axis=-1, keepdims=True)
        p = jnp.exp(att)
        p = p * pl.reciprocal(jnp.sum(p, axis=-1, keepdims=True), approx=True)
        oh = jnp.dot(p.astype(jnp.bfloat16), vh,
                     preferred_element_type=jnp.float32)                # (T, hd)
        # Fold the output projection per head (avoids concat lane shuffles).
        attn_acc = attn_acc + jnp.dot(oh.astype(jnp.bfloat16), wproj[sl, :],
                                      preferred_element_type=jnp.float32)

    # drop_path acts as identity in inference mode
    x = x + attn_acc + bproj_ref[0]

    # ---------------- MLP branch ----------------
    xn2 = _layernorm(x, ln2g_ref[0], ln2b_ref[0]).astype(jnp.bfloat16)
    h1 = (jnp.dot(xn2, wfc1_ref[0], preferred_element_type=jnp.float32)
          + bfc1_ref[0])
    # TODO(synk): PyTorch nn.GELU is exact-erf; tanh approximation used here.
    h1 = jax.nn.gelu(h1, approximate=True).astype(jnp.bfloat16)
    h2 = (jnp.dot(h1, wfc2_ref[0], preferred_element_type=jnp.float32)
          + bfc2_ref[0])
    x = x + h2

    act_ref[...] = x

    @pl.when(l == n_layers - 1)
    def _():
        # Final encoder LayerNorm fused into the last layer step.
        o_ref[0] = _layernorm(x, lng_ref[0], lnb_ref[0]).astype(o_ref.dtype)


# ----------------------------- kernel wrappers -----------------------------

def patch_embed(x, w, b, pos):
    # x: (B, Np, kdim), w: (kdim, emb) bf16, b: (1, emb), pos: (Np, emb)
    B, Np, kdim = x.shape
    emb = w.shape[1]
    return pl.pallas_call(
        _patch_embed_kernel,
        out_shape=jax.ShapeDtypeStruct((B, Np, emb), jnp.float32),
        grid=(B,),
        in_specs=[
            pl.BlockSpec((1, Np, kdim), lambda bb: (bb, 0, 0)),
            pl.BlockSpec((kdim, emb), lambda bb: (0, 0)),
            pl.BlockSpec((1, emb), lambda bb: (0, 0)),
            pl.BlockSpec((Np, emb), lambda bb: (0, 0)),
        ],
        out_specs=pl.BlockSpec((1, Np, emb), lambda bb: (bb, 0, 0)),
        compiler_params=pltpu.CompilerParams(
            dimension_semantics=("parallel",)),
    )(x, w, b, pos)


def transformer_encode(x, blk, ln_g, ln_b, num_heads):
    """Run all transformer blocks + final LayerNorm in one pallas_call."""
    B, T, C = x.shape
    L = blk['wqkv'].shape[0]
    kern = functools.partial(_encoder_kernel, num_heads=num_heads)

    xmap = lambda b, l: (b, 0, 0)     # activation: per-batch block, resident over l
    wl = lambda b, l: (l, 0, 0)       # per-layer stacked weights
    g0 = lambda b, l: (0, 0, 0)       # final LN params (shared)

    return pl.pallas_call(
        kern,
        out_shape=jax.ShapeDtypeStruct((B, T, C), jnp.float32),
        grid=(B, L),
        in_specs=[
            pl.BlockSpec((1, T, C), xmap),           # x (one batch element)
            pl.BlockSpec((1, 1, C), wl),             # ln1 gamma
            pl.BlockSpec((1, 1, C), wl),             # ln1 beta
            pl.BlockSpec((1, C, 3 * C), wl),         # qkv weight (no bias: timm default)
            pl.BlockSpec((1, C, C), wl),             # proj weight
            pl.BlockSpec((1, 1, C), wl),             # proj bias
            pl.BlockSpec((1, 1, C), wl),             # ln2 gamma
            pl.BlockSpec((1, 1, C), wl),             # ln2 beta
            pl.BlockSpec((1, C, 4 * C), wl),         # fc1 weight
            pl.BlockSpec((1, 1, 4 * C), wl),         # fc1 bias
            pl.BlockSpec((1, 4 * C, C), wl),         # fc2 weight
            pl.BlockSpec((1, 1, C), wl),             # fc2 bias
            pl.BlockSpec((1, 1, C), g0),             # final LN gamma
            pl.BlockSpec((1, 1, C), g0),             # final LN beta
        ],
        out_specs=pl.BlockSpec((1, T, C), xmap),
        scratch_shapes=[pltpu.VMEM((T, C), jnp.float32)],
        compiler_params=pltpu.CompilerParams(
            dimension_semantics=("parallel", "arbitrary"),
            vmem_limit_bytes=64 * 1024 * 1024),
    )(x, blk['ln1_g'], blk['ln1_b'], blk['wqkv'], blk['wproj'], blk['bproj'],
      blk['ln2_g'], blk['ln2_b'], blk['wfc1'], blk['bfc1'], blk['wfc2'],
      blk['bfc2'], ln_g, ln_b)


# ----------------------------- MAE encoder forward -----------------------------

def mae_encoder_forward(img, params, *, patch_size, num_heads, mask_ratio,
                        shuffle_seed=0):
    B, Cin, H, W = img.shape
    ph, pw = patch_size
    nh, nw = H // ph, W // pw
    Np = nh * nw
    emb = params['w_patch'].shape[1]

    # Patchify: Conv2d(kernel=stride=patch) as im2col + matmul (pos add fused).
    # TODO(synk): im2col reshape/transpose is plain JAX (no dense-kernel benefit).
    x = img.reshape(B, Cin, nh, ph, nw, pw)
    x = x.transpose(0, 2, 4, 1, 3, 5).reshape(B, Np, Cin * ph * pw)
    patches = patch_embed(x, params['w_patch'], params['b_patch'],
                          params['pos_embedding'])                 # (B, Np, emb)

    # PatchShuffle (deterministic seeded permutation replaces np.random.shuffle)
    rng = np.random.default_rng(shuffle_seed)
    fwd = np.stack([rng.permutation(Np) for _ in range(B)], axis=-1)  # (Np, B)
    bwd = np.argsort(fwd, axis=0)                                     # (Np, B)
    remain_T = int(Np * (1 - mask_ratio))
    fwd_bn = jnp.asarray(fwd.T, dtype=jnp.int32)                      # (B, Np)
    patches = jnp.take_along_axis(patches, fwd_bn[:, :, None], axis=1)
    patches = patches[:, :remain_T]                                   # (B, rT, emb)

    cls = jnp.broadcast_to(params['cls_token'].reshape(1, 1, emb), (B, 1, emb))
    tokens = jnp.concatenate([cls, patches], axis=1)                  # (B, T, emb)

    feats = transformer_encode(tokens, params['blocks'], params['ln_g'],
                               params['ln_b'], num_heads)             # (B, T, emb)
    feats = feats.transpose(1, 0, 2)                                  # (T, B, emb)
    return feats, jnp.asarray(bwd, dtype=jnp.int32)


# ----------------------------- parameter init -----------------------------

def init_params(key, *, image_channels, patch_size, emb_dim, num_layer,
                num_patches):
    ph, pw = patch_size
    kdim = image_channels * ph * pw
    keys = jax.random.split(key, 3 + num_layer)

    def nrm(k, shape, std=0.02):
        return jax.random.normal(k, shape, dtype=jnp.float32) * std

    L, C = num_layer, emb_dim
    blk_keys = [jax.random.split(keys[3 + l], 4) for l in range(num_layer)]

    params = {
        'w_patch': nrm(keys[0], (kdim, C)).astype(jnp.bfloat16),   # conv w (reshaped)
        'b_patch': jnp.zeros((1, C), jnp.float32),
        'cls_token': nrm(keys[1], (1, 1, C)),                      # trunc_normal(0.02)
        'pos_embedding': nrm(keys[2], (num_patches, C)),
        'ln_g': jnp.ones((1, 1, C), jnp.float32),
        'ln_b': jnp.zeros((1, 1, C), jnp.float32),
        'blocks': {
            'ln1_g': jnp.ones((L, 1, C), jnp.float32),
            'ln1_b': jnp.zeros((L, 1, C), jnp.float32),
            'wqkv': jnp.stack([nrm(k[0], (C, 3 * C)) for k in blk_keys]
                              ).astype(jnp.bfloat16),
            'wproj': jnp.stack([nrm(k[1], (C, C)) for k in blk_keys]
                               ).astype(jnp.bfloat16),
            'bproj': jnp.zeros((L, 1, C), jnp.float32),
            'ln2_g': jnp.ones((L, 1, C), jnp.float32),
            'ln2_b': jnp.zeros((L, 1, C), jnp.float32),
            'wfc1': jnp.stack([nrm(k[2], (C, 4 * C)) for k in blk_keys]
                              ).astype(jnp.bfloat16),
            'bfc1': jnp.zeros((L, 1, 4 * C), jnp.float32),
            'wfc2': jnp.stack([nrm(k[3], (4 * C, C)) for k in blk_keys]
                              ).astype(jnp.bfloat16),
            'bfc2': jnp.zeros((L, 1, C), jnp.float32),
        },
    }
    return params


# ----------------------------- main -----------------------------

if __name__ == "__main__":
    IMAGE_SIZE = (16, 16)
    CHANNELS = 3
    PATCH = (4, 4)
    EMB = 32
    LAYERS = 2
    HEADS = 2
    MASK_RATIO = 0.75
    B = 2

    key = jax.random.PRNGKey(0)
    k_img, k_par = jax.random.split(key)
    img = jax.random.normal(k_img, (B, CHANNELS) + IMAGE_SIZE, dtype=jnp.float32)

    Np = (IMAGE_SIZE[0] // PATCH[0]) * (IMAGE_SIZE[1] // PATCH[1])
    params = init_params(k_par, image_channels=CHANNELS, patch_size=PATCH,
                         emb_dim=EMB, num_layer=LAYERS, num_patches=Np)

    feats, backward_indexes = mae_encoder_forward(
        img, params, patch_size=PATCH, num_heads=HEADS, mask_ratio=MASK_RATIO)
    jax.block_until_ready(feats)
    jax.block_until_ready(backward_indexes)

    expected_T = int(Np * (1 - MASK_RATIO)) + 1
    assert feats.shape == (expected_T, B, EMB), feats.shape
    assert backward_indexes.shape == (Np, B), backward_indexes.shape
    assert bool(jnp.all(jnp.isfinite(feats)))
    print("KERNEL_OK")
</pallas_src>

<mosaic_0001>
module attributes {stable_mosaic.version = 11 : i64} {
  func.func @_patch_embed_kernel(%arg0: i32, %arg1: memref<1x16x48xf32, #tpu.memory_space<vmem>>, %arg2: memref<48x32xbf16, #tpu.memory_space<vmem>>, %arg3: memref<1x32xf32, #tpu.memory_space<vmem>>, %arg4: memref<16x32xf32, #tpu.memory_space<vmem>>, %arg5: memref<1x16x32xf32, #tpu.memory_space<vmem>>) attributes {dimension_semantics = [#tpu.dimension_semantics<parallel>], iteration_bounds = array<i64: 2>, scalar_prefetch = 0 : i64, scratch_operands = 0 : i64, tpu.core_type = #tpu.core_type<tc>, window_params = [{transform_indices = @transform_0, window_bounds = array<i64: 1, 16, 48>}, {pipeline_mode = #tpu.pipeline_mode<synchronous>, transform_indices = @transform_1, window_bounds = array<i64: 48, 32>}, {pipeline_mode = #tpu.pipeline_mode<synchronous>, transform_indices = @transform_2, window_bounds = array<i64: 1, 32>}, {pipeline_mode = #tpu.pipeline_mode<synchronous>, transform_indices = @transform_3, window_bounds = array<i64: 16, 32>}, {transform_indices = @transform_4, window_bounds = array<i64: 1, 16, 32>}]} {
    %c0 = arith.constant 0 : index
    %c0_0 = arith.constant 0 : index
    %c0_1 = arith.constant 0 : index
    %0 = vector.load %arg1[%c0, %c0_0, %c0_1] : memref<1x16x48xf32, #tpu.memory_space<vmem>>, vector<1x16x48xf32>
    %1 = vector.shape_cast %0 : vector<1x16x48xf32> to vector<16x48xf32>
    %2 = arith.truncf %1 : vector<16x48xf32> to vector<16x48xbf16>
    %c0_2 = arith.constant 0 : index
    %c0_3 = arith.constant 0 : index
    %3 = vector.load %arg2[%c0_2, %c0_3] : memref<48x32xbf16, #tpu.memory_space<vmem>>, vector<48x32xbf16>
    %cst = arith.constant dense<0.000000e+00> : vector<16x32xf32>
    %4 = tpu.matmul %2, %3, %cst {dimension_numbers = #tpu.dot_dimension_numbers<[1], [0], [0], [1], [0, 0, 1, 1], [], []>} : vector<16x48xbf16>, vector<48x32xbf16>, vector<16x32xf32> -> vector<16x32xf32>
    %c0_4 = arith.constant 0 : index
    %c0_5 = arith.constant 0 : index
    %5 = vector.load %arg3[%c0_4, %c0_5] : memref<1x32xf32, #tpu.memory_space<vmem>>, vector<1x32xf32>
    %6 = vector.broadcast %5 : vector<1x32xf32> to vector<16x32xf32>
    %7 = arith.addf %4, %6 : vector<16x32xf32>
    %c0_6 = arith.constant 0 : index
    %c0_7 = arith.constant 0 : index
    %8 = vector.load %arg4[%c0_6, %c0_7] : memref<16x32xf32, #tpu.memory_space<vmem>>, vector<16x32xf32>
    %9 = arith.addf %7, %8 : vector<16x32xf32>
    %c0_8 = arith.constant 0 : index
    %c0_9 = arith.constant 0 : index
    %c0_10 = arith.constant 0 : index
    %10 = vector.load %arg5[%c0_8, %c0_9, %c0_10] : memref<1x16x32xf32, #tpu.memory_space<vmem>>, vector<1x16x32xf32>
    %11 = vector.shape_cast %10 : vector<1x16x32xf32> to vector<16x32xf32>
    %12 = vector.shape_cast %9 : vector<16x32xf32> to vector<1x16x32xf32>
    tpu.vector_store %arg5[%c0_8, %c0_9, %c0_10], %12 {strides = array<i32>} : memref<1x16x32xf32, #tpu.memory_space<vmem>>, vector<1x16x32xf32>,
    return
  }
  func.func @transform_0(%arg0: i32) -> (i32, i32, i32) {
    %c0_i32 = arith.constant 0 : i32
    %c0_i32_0 = arith.constant 0 : i32
    %c0_i32_1 = arith.constant 0 : i32
    return %arg0, %c0_i32, %c0_i32_0 : i32, i32, i32
  }
  func.func @transform_1(%arg0: i32) -> (i32, i32) {
    %c0_i32 = arith.constant 0 : i32
    %c0_i32_0 = arith.constant 0 : i32
    %c0_i32_1 = arith.constant 0 : i32
    return %c0_i32, %c0_i32_0 : i32, i32
  }
  func.func @transform_2(%arg0: i32) -> (i32, i32) {
    %c0_i32 = arith.constant 0 : i32
    %c0_i32_0 = arith.constant 0 : i32
    %c0_i32_1 = arith.constant 0 : i32
    return %c0_i32, %c0_i32_0 : i32, i32
  }
  func.func @transform_3(%arg0: i32) -> (i32, i32) {
    %c0_i32 = arith.constant 0 : i32
    %c0_i32_0 = arith.constant 0 : i32
    %c0_i32_1 = arith.constant 0 : i32
    return %c0_i32, %c0_i32_0 : i32, i32
  }
  func.func @transform_4(%arg0: i32) -> (i32, i32, i32) {
    %c0_i32 = arith.constant 0 : i32
    %c0_i32_0 = arith.constant 0 : i32
    %c0_i32_1 = arith.constant 0 : i32
    return %arg0, %c0_i32, %c0_i32_0 : i32, i32, i32
  }
}

</mosaic_0001>

<llo_original>
// kernel: tpu_custom_call.1
$region0: #{tpu_custom_call.1}
  #allocation0 [shape = 'u32[]', space=smem, size = 0x4, offset = 0x4, fixed_abs, tag = 'smem constant byte address 0x4 - core index']
  #allocation1 [shape = 'u32[72,128]{1,0:T(1,128)}', space=vmem, size = 0x9000, scoped, tag = 'internal scratch']
  %s0 = inlined_call_operand.vmem [shape: f32[2,16,48], index: 0, kind: input, shape index: {}]
  %s1 = inlined_call_operand.vmem [shape: bf16[48,32], index: 1, kind: input, shape index: {}]
  %s2 = inlined_call_operand.vmem [shape: f32[1,32], index: 2, kind: input, shape index: {}]
  %s3 = inlined_call_operand.hbm [shape: f32[16,32], index: 3, kind: input, shape index: {}]
  %s4 = inlined_call_operand.hbm [shape: f32[2,16,32], index: 4, kind: output, shape index: {}]
  %s5 = sld [smem:[#allocation0]]
  $region53: #{tpu_custom_call.1} parent=0
    _
  %s7 = ssub.s32 1, %s5
  %s8 = scalar_select 0, %s7, %s5
  $region1: #{tpu_custom_call.1} parent=0
    #allocation2 [shape = 'u8[8192]{0}', space=vmem, size = 0x2000, scoped, tag = 'input window, operand 3, single buffered']
    #allocation3 [shape = 's32[2]{0}', space=sflag, size = 0x8, scoped, tag = 'scoped memory for tpu_custom_call.1']
    #allocation4 [shape = 's32[2]{0}', space=sflag, size = 0x8, scoped, tag = 'scoped memory for tpu_custom_call.1']
    #allocation5 [shape = 'u8[16384]{0}', space=vmem, size = 0x4000, scoped, tag = 'output window, operand 0']
    %9 = vsyncpa [#allocation3], 0
    %10 = vsyncpa [#allocation4], 0
    %s11 = scalar_lea.sflag [#allocation4], 1
    %12 = vsyncpa %s11, 0
    loop: start=0, step=1, limit=4
    $region2: #{tpu_custom_call.1} parent=1 // loop_pre_header
      _
    $region3: #{tpu_custom_call.1} parent=1 // loop_header
      %s14 = sphi 0, %s18
      %p15 = scmp.ge.s32.totalorder %s14, 4
      %s24 = sphi 0, %s26
      %s27 = sphi 0, %s24
      %s28 = sphi 0, %s27
      %s44 = sphi 0, %s28
      %s48 = sphi 0, %s48
      %s50 = sphi 0, %s48
      %s51 = sphi 0, %s50
      %s65 = sphi 0, %s51
      %s69 = sphi 0, %s69
      %s71 = sphi 0, %s69
      %s72 = sphi 0, %s71
      %s86 = sphi 0, %s72
      %s90 = sphi 0, %s90
      %s92 = sphi 0, %s90
      %s93 = sphi 0, %s92
      %s107 = sphi 0, %s93
      %s113 = sphi 0, %s115
      %s116 = sphi 0, %s113
      %s117 = sphi 0, %s116
      %s133 = sphi 0, %s117
    $region4: #{tpu_custom_call.1} parent=1 // loop_header_branch
      %17 = sbr.rel (%p15) target = $region8
    $region5: #{tpu_custom_call.1} parent=1 // loop_body
      %s19 = ssub.s32 %s14, 1
      %s20 = ssub.s32 %s14, 2
      %s21 = sadd.s32 %s14, 1
      %s22 = ssub.s32 %s14, %s21
      %p23 = scmp.eq.s32.totalorder %s22, 0
      %s25 = sadd.s32 %s24, 1
      %s26 = scalar_select %p23, %s24, %s25
      %p29 = pneg %p23
      %p30 = scmp.eq.s32.totalorder %s14, 1
      %p31 = por %p29, %p30
      %p32 = scmp.ne.s32.totalorder %s24, %s27
      %p33 = scmp.eq.s32.totalorder %s14, 0
      %p34 = por %p32, %p33
      %p35 = scmp.ne.s32.totalorder %s24, %s27
      %p36 = scmp.eq.s32.totalorder %s19, 1
      %p37 = por %p35, %p36
      %p38 = scmp.ne.s32.totalorder %s27, %s28
      %p39 = scmp.eq.s32.totalorder %s19, 0
      %p40 = por %p38, %p39
      %p41 = scmp.ne.s32.totalorder %s27, %s28
      %p42 = scmp.eq.s32.totalorder %s20, 1
      %p43 = por %p41, %p42
      %p45 = scmp.ne.s32.totalorder %s28, %s44
      %p46 = scmp.eq.s32.totalorder %s20, 0
      %p47 = por %p45, %p46
      %s49 = sadd.s32 %s48, 1
      %p52 = scmp.eq.s32.totalorder %s14, 1
      %p53 = scmp.ne.s32.totalorder %s48, %s50
      %p54 = scmp.eq.s32.totalorder %s14, 0
      %p55 = por %p53, %p54
      %p56 = scmp.ne.s32.totalorder %s48, %s50
      %p57 = scmp.eq.s32.totalorder %s19, 1
      %p58 = por %p56, %p57
      %p59 = scmp.ne.s32.totalorder %s50, %s51
      %p60 = scmp.eq.s32.totalorder %s19, 0
      %p61 = por %p59, %p60
      %p62 = scmp.ne.s32.totalorder %s50, %s51
      %p63 = scmp.eq.s32.totalorder %s20, 1
      %p64 = por %p62, %p63
      %p66 = scmp.ne.s32.totalorder %s51, %s65
      %p67 = scmp.eq.s32.totalorder %s20, 0
      %p68 = por %p66, %p67
      %s70 = sadd.s32 %s69, 1
      %p73 = scmp.eq.s32.totalorder %s14, 1
      %p74 = scmp.ne.s32.totalorder %s69, %s71
      %p75 = scmp.eq.s32.totalorder %s14, 0
      %p76 = por %p74, %p75
      %p77 = scmp.ne.s32.totalorder %s69, %s71
      %p78 = scmp.eq.s32.totalorder %s19, 1
      %p79 = por %p77, %p78
      %p80 = scmp.ne.s32.totalorder %s71, %s72
      %p81 = scmp.eq.s32.totalorder %s19, 0
      %p82 = por %p80, %p81
      %p83 = scmp.ne.s32.totalorder %s71, %s72
      %p84 = scmp.eq.s32.totalorder %s20, 1
      %p85 = por %p83, %p84
      %p87 = scmp.ne.s32.totalorder %s72, %s86
      %p88 = scmp.eq.s32.totalorder %s20, 0
      %p89 = por %p87, %p88
      %s91 = sadd.s32 %s90, 1
      %p94 = scmp.eq.s32.totalorder %s14, 1
      %p95 = scmp.ne.s32.totalorder %s90, %s92
      %p96 = scmp.eq.s32.totalorder %s14, 0
      %p97 = por %p95, %p96
      %p98 = scmp.ne.s32.totalorder %s90, %s92
      %p99 = scmp.eq.s32.totalorder %s19, 1
      %p100 = por %p98, %p99
      %p101 = scmp.ne.s32.totalorder %s92, %s93
      %p102 = scmp.eq.s32.totalorder %s19, 0
      %p103 = por %p101, %p102
      %p104 = scmp.ne.s32.totalorder %s92, %s93
      %p105 = scmp.eq.s32.totalorder %s20, 1
      %p106 = por %p104, %p105
      %p108 = scmp.ne.s32.totalorder %s93, %s107
      %p109 = scmp.eq.s32.totalorder %s20, 0
      %p110 = por %p108, %p109
      %s111 = ssub.s32 %s14, %s21
      %p112 = scmp.eq.s32.totalorder %s111, 0
      %s114 = sadd.s32 %s113, 1
      %s115 = scalar_select %p112, %s113, %s114
      %p118 = pneg %p112
      %p119 = scmp.eq.s32.totalorder %s14, 1
      %p120 = por %p118, %p119
      %p121 = scmp.ne.s32.totalorder %s113, %s116
      %p122 = scmp.eq.s32.totalorder %s14, 0
      %p123 = por %p121, %p122
      %p124 = scmp.ne.s32.totalorder %s113, %s116
      %p125 = scmp.eq.s32.totalorder %s19, 1
      %p126 = por %p124, %p125
      %p127 = scmp.ne.s32.totalorder %s116, %s117
      %p128 = scmp.eq.s32.totalorder %s19, 0
      %p129 = por %p127, %p128
      %p130 = scmp.ne.s32.totalorder %s116, %s117
      %p131 = scmp.eq.s32.totalorder %s20, 1
      %p132 = por %p130, %p131
      %p134 = scmp.ne.s32.totalorder %s117, %s133
      %p135 = scmp.eq.s32.totalorder %s20, 0
      %p136 = por %p134, %p135
      %p137 = scmp.le.s32.totalorder 1, %s14
      %p138 = scmp.lt.s32.totalorder %s14, 3
      %p139 = pnand %p137, %p138
      %p140 = pneg %p139
      // Predicated region
      $region9: #{tpu_custom_call.1} parent=5 // pred_check
        _
      $region10: #{tpu_custom_call.1} parent=5 // pred_check_branch
        %142 = sbr.rel (%p139) target = $region12
      $region11: #{tpu_custom_call.1} parent=5 // pred_region
        %s143 = ssub.s32 %s14, 1
        // Predicated region
        $region13: #{tpu_custom_call.1} parent=11 // pred_check
          %p144 = pneg %p61
        $region14: #{tpu_custom_call.1} parent=11 // pred_check_branch
          %146 = sbr.rel (%p144) target = $region16
        $region15: #{tpu_custom_call.1} parent=11 // pred_region
          _
        $region16: #{tpu_custom_call.1} parent=11 // pred_fallthru
          _
        // Predicated region
        $region17: #{tpu_custom_call.1} parent=11 // pred_check
          %p147 = pneg %p82
        $region18: #{tpu_custom_call.1} parent=11 // pred_check_branch
          %149 = sbr.rel (%p147) target = $region20
        $region19: #{tpu_custom_call.1} parent=11 // pred_region
          _
        $region20: #{tpu_custom_call.1} parent=11 // pred_fallthru
          _
        // Predicated region
        $region21: #{tpu_custom_call.1} parent=11 // pred_check
          %p150 = pneg %p103
        $region22: #{tpu_custom_call.1} parent=11 // pred_check_branch
          %152 = sbr.rel (%p150) target = $region24
        $region23: #{tpu_custom_call.1} parent=11 // pred_region
          %154 = vsyncadd [#allocation3], 0
          %s155 = sshll.u32 %s3, 4
          %s156 = int_to_ptr.hbm [resolvable:$true] %s155
          %s157 = sshll.u32 [#allocation2], 4
          %s158 = int_to_ptr.vmem [resolvable:$true] %s157
          %163 = dma.hbm_to_vmem [thread:$0]  %s156, 256, %s158, [#allocation3], 128, 128, 8
        $region24: #{tpu_custom_call.1} parent=11 // pred_fallthru
          _
      $region12: #{tpu_custom_call.1} parent=5 // pred_fallthru
        _
      %p164 = scmp.lt.s32.totalorder %s14, 2
      // Predicated region
      $region25: #{tpu_custom_call.1} parent=5 // pred_check
        %p165 = pneg %p164
      $region26: #{tpu_custom_call.1} parent=5 // pred_check_branch
        %167 = sbr.rel (%p165) target = $region28
      $region27: #{tpu_custom_call.1} parent=5 // pred_region
        // Predicated region
        $region29: #{tpu_custom_call.1} parent=27 // pred_check
          %p168 = pneg %p34
        $region30: #{tpu_custom_call.1} parent=27 // pred_check_branch
          %170 = sbr.rel (%p168) target = $region32
        $region31: #{tpu_custom_call.1} parent=27 // pred_region
          %p171 = scmp.lt.s32.totalorder %s14, 1
          %s172 = scalar_select %p171, %s14, 1
          %s173 = smul.addr %s172, 2
          %s174 = smul.addr %s173, 8
          %s175 = scalar_lea.vmem %s0, %s174
        $region32: #{tpu_custom_call.1} parent=27 // pred_fallthru
          _
      $region28: #{tpu_custom_call.1} parent=5 // pred_fallthru
        _
      %p176 = scmp.le.s32.totalorder 1, %s14
      %p177 = scmp.lt.s32.totalorder %s14, 3
      %p178 = pnand %p176, %p177
      %p179 = pneg %p178
      // Predicated region
      $region33: #{tpu_custom_call.1} parent=5 // pred_check
        _
      $region34: #{tpu_custom_call.1} parent=5 // pred_check_branch
        %181 = sbr.rel (%p178) target = $region36
      $region35: #{tpu_custom_call.1} parent=5 // pred_region
        %s182 = ssub.s32 %s14, 1
        // Predicated region
        $region37: #{tpu_custom_call.1} parent=35 // pred_check
          %p183 = pneg %p103
        $region38: #{tpu_custom_call.1} parent=35 // pred_check_branch
          %185 = sbr.rel (%p183) target = $region40
        $region39: #{tpu_custom_call.1} parent=35 // pred_region
          %187 = dma.done [#allocation3], 256
        $region40: #{tpu_custom_call.1} parent=35 // pred_fallthru
          _
        %p188 = scmp.lt.s32.totalorder %s19, 1
        %s189 = scalar_select %p188, %s19, 1
        %s190 = smul.addr %s189, 2
        %s191 = smul.addr %s190, 8
        %s192 = scalar_lea.vmem %s0, %s191
        %p193 = pneg %p40
        %p194 = pneg %p37
        %p195 = pneg %p61
        %p196 = pneg %p58
        %p197 = pneg %p82
        %p198 = pneg %p79
        %p199 = pneg %p103
        %p200 = pneg %p100
        %p201 = pneg %p129
        %p202 = pneg %p126
        %s203 = sand.u32 %s116, 1
        %s204 = scalar_lea.sflag [#allocation4], %s203
        %s205 = sand.u32 %s116, 1
        %s206 = smul.addr %s205, 16
        %s207 = scalar_lea.vmem [#allocation5], %s206
        %p208 = scmp.lt.s32.totalorder %s19, 1
        %s209 = scalar_select %p208, %s19, 1
        %s210 = smul.addr %s209, 2
        %s211 = smul.addr %s210, 8
        %s212 = scalar_lea.vmem %s0, %s211
        %v214 = vld [vmem:[%s212] sm:$0xff]
        %v215 = vld [vmem:[%s212 + $0x8] sm:$0xff]
        %v216 = vpack.c.bf16 %v215, %v214
        %v217 = vld [vmem:[%s1] sm:$0xf]
        %v218 = vld [vmem:[%s1 + $0x4] sm:$0xf]
        %v219 = vld [vmem:[%s1 + $0x8] sm:$0xf]
        %v220 = vld [vmem:[%s1 + $0xc] sm:$0xf]
        %v221 = vld [vmem:[%s1 + $0x10] sm:$0xf]
        %v222 = vld [vmem:[%s1 + $0x14] sm:$0xf]
        %v223 = vld [vmem:[%s2] sm:$0x1]
        %v225 = vperm.slane %v223, 0
        %v233 = vunpack.c.l.b16 %v217
        %v234 = vunpack.c.l.b16 %v218
        %v235 = vunpack.c.l.b16 %v219
        %v236 = vunpack.c.l.b16 %v220
        %v237 = vunpack.c.l.b16 %v221
        %v238 = vunpack.c.l.b16 %v222
        %v239 = vpack.c.b16 %v234, %v233
        %v240 = vpack.c.b16 %v236, %v235
        %v241 = vpack.c.b16 %v238, %v237
        %vm245 = vcmask 392192
        %v247 = vsel %vm245, %v216, 0
        %249 = vmatpush.bf16.msra.mxu0 0
        %250 = vmatpush.bf16.msra.mxu0 0
        %251 = vmatpush.bf16.msra.mxu0 0
        %252 = vmatpush.bf16.msra.mxu0 0
        %253 = vmatpush.bf16.msra.mxu0 0
        %254 = vmatpush.bf16.msra.mxu0 %v241
        %255 = vmatpush.bf16.msra.mxu0 %v240
        %256 = vmatpush.bf16.msra.mxu0 %v239
        %257 = vmatmul.bf16.gmra.mxu0 %v247
        %v258 = vpop.f32.mrf.mxu0
        %v259 = vadd.f32 %v225, %v258
        %v260 = vpop.f32.mrf.mxu0
        %v261 = vadd.f32 %v225, %v260
        %262 = vdwg.mxu0
        %v263 = vld [vmem:[#allocation2] sm:$0xff]
        %v264 = vld [vmem:[#allocation2 + $0x8] sm:$0xff]
        %v265 = vadd.f32 %v259, %v263
        %v266 = vadd.f32 %v261, %v264
        %vm267 = vcmask 261120
        %268 = vst.msk [vmem:[%s207] sm:$0xff] %vm267, %v265
        %269 = vst.msk [vmem:[%s207 + $0x8] sm:$0xff] %vm267, %v266
        %s270 = sand.u32 %s116, 1
        %s271 = scalar_lea.sflag [#allocation4], %s270
        %s272 = sand.u32 %s116, 1
        %s273 = smul.addr %s272, 16
        %s274 = scalar_lea.vmem [#allocation5], %s273
        // Predicated region
        $region41: #{tpu_custom_call.1} parent=35 // pred_check
          %p275 = pneg %p126
        $region42: #{tpu_custom_call.1} parent=35 // pred_check_branch
          %277 = sbr.rel (%p275) target = $region44
        $region43: #{tpu_custom_call.1} parent=35 // pred_region
          %279 = vsyncadd %s271, 0
          %s280 = smul.addr %s19, 2
          %s281 = smul.addr %s280, 8
          %s282 = scalar_lea.hbm %s4, %s281
          %s283 = sshll.u32 %s274, 4
          %s284 = int_to_ptr.vmem [resolvable:$true] %s283
          %s285 = sshll.u32 %s282, 4
          %s286 = int_to_ptr.hbm [resolvable:$true] %s285
          %291 = dma.vmem_to_hbm [thread:$0]  %s284, 256, %s286, %s271, 128, 128, 8
        $region44: #{tpu_custom_call.1} parent=35 // pred_fallthru
          _
      $region36: #{tpu_custom_call.1} parent=5 // pred_fallthru
        _
      %p292 = scmp.le.s32.totalorder 2, %s14
      // Predicated region
      $region45: #{tpu_custom_call.1} parent=5 // pred_check
        %p293 = pneg %p292
      $region46: #{tpu_custom_call.1} parent=5 // pred_check_branch
        %295 = sbr.rel (%p293) target = $region48
      $region47: #{tpu_custom_call.1} parent=5 // pred_region
        %s296 = ssub.s32 %s14, 2
        // Predicated region
        $region49: #{tpu_custom_call.1} parent=47 // pred_check
          %p297 = pneg %p132
        $region50: #{tpu_custom_call.1} parent=47 // pred_check_branch
          %299 = sbr.rel (%p297) target = $region52
        $region51: #{tpu_custom_call.1} parent=47 // pred_region
          %s300 = sand.u32 %s117, 1
          %s301 = scalar_lea.sflag [#allocation4], %s300
          %s302 = sand.u32 %s117, 1
          %s303 = smul.addr %s302, 16
          %s304 = scalar_lea.vmem [#allocation5], %s303
          %306 = dma.done %s301, 256
        $region52: #{tpu_custom_call.1} parent=47 // pred_fallthru
          _
      $region48: #{tpu_custom_call.1} parent=5 // pred_fallthru
        _
    $region6: #{tpu_custom_call.1} parent=1 // loop_footer
      %s18 = sadd.s32 1, %s14
    $region7: #{tpu_custom_call.1} parent=1 // loop_footer_branch
      %13 = sbr.rel target = $region3
    $region8: #{tpu_custom_call.1} parent=1 // loop_exit
      _
    %307 = vsyncpa [#allocation3], 1
    %s308 = scalar_lea.sflag [#allocation3], 1
    %309 = vsyncpa %s308, 1
    %310 = vsyncpa [#allocation4], 1
    %s311 = scalar_lea.sflag [#allocation4], 1
    %312 = vsyncpa %s311, 1

</llo_original>
